<compile_context>
chip_gen: v7x
topology: tpu7x:2x2x1
jax: 0.10.0
libtpu: 0.0.40
codegen_flags: <defaults>
</compile_context>

<pallas_src>
import functools

import jax
import jax.numpy as jnp
from jax.experimental import pallas as pl
from jax.experimental.pallas import tpu as pltpu


def _round_up(x, m):
    return ((x + m - 1) // m) * m


def _critic_kernel(x_ref, w1_ref, b1_ref, w2_ref, b2_ref, wh_ref, bh_ref,
                   out_ref):
    """One batch tile of the critic forward.

    x_ref : (TILE_B, F) f32 (cast to bf16 in-kernel)
    w1_ref: (F, H) bf16     b1_ref: (1, H) f32
    w2_ref: (H, H) bf16     b2_ref: (1, H) f32
    wh_ref: (1, H) f32      bh_ref: (1,)   f32  (SMEM scalar)
    out_ref: (1, 1, TILE_B) f32  (lane-dense row of per-sample values)
    """
    # In-kernel f32->bf16 cast: rides idle VPU slots, avoids a separate
    # wrapper-side HBM pass over x.
    x = x_ref[...].astype(jnp.bfloat16)

    # hidden layer 1: Linear + ReLU (bf16 MXU operands, f32 accumulate/epilogue)
    h1 = jnp.dot(x, w1_ref[...], preferred_element_type=jnp.float32)
    h1 = jnp.maximum(h1 + b1_ref[...], 0.0)

    # hidden layer 2: Linear (last layer of `hidden`); ReLU from Critic.forward
    h2 = jnp.dot(h1.astype(jnp.bfloat16), w2_ref[...],
                 preferred_element_type=jnp.float32)
    h2 = jnp.maximum(h2 + b2_ref[...], 0.0)

    # head Linear(H, 1) as an NT matmul (1,H) x (TILE_B,H)^T -> (1, TILE_B):
    # the result is produced directly in a lane-dense row (no (TILE_B,1)
    # lane-sparse masked stores, contiguous writeback DMA). Kept f32 for
    # accuracy of the final reduction; the MXU is otherwise idle here.
    v = jnp.einsum("oh,bh->ob", wh_ref[...], h2,
                   preferred_element_type=jnp.float32)
    out_ref[0] = v + bh_ref[0]


def _select_tile(batch, max_tile):
    """Per-step batch tile: multiple of 128, <= batch, >=2 tiles for big B."""
    if batch <= 128:
        return max(8, _round_up(batch, 8))          # single small tile
    tile = min(max_tile, (batch // 128) * 128)      # multiple of 128, <= batch
    if batch > 256:
        # Guarantee >= 2 grid steps so v7x can shard the batch across its two
        # TensorCores (no-op on single-TC v5e/v6e).
        tile = min(tile, _round_up(-(-batch // 2), 128))
    return tile


def _padded_vmem_bytes(rows, cols, itemsize):
    return _round_up(rows, 8) * _round_up(cols, 128) * itemsize


@functools.partial(jax.jit, static_argnames=("max_tile_b",))
def critic_forward(x, w1, b1, w2, b2, wh_row, bh, *, max_tile_b=2048):
    """x: (B, F) f32.  Hidden weights pre-transposed to (in, out); wh_row (1, H)."""
    B_orig, F = x.shape
    H = w1.shape[1]

    # Only pad when B is not 8-row aligned (rare); no full pad/cast pass over x.
    B = B_orig
    if B % 8:
        x = jnp.pad(x, ((0, _round_up(B, 8) - B), (0, 0)))
        B = x.shape[0]

    tile_b = _select_tile(B, max_tile_b)
    num_tiles = pl.cdiv(B, tile_b)
    rows = num_tiles * tile_b

    # Weight casts are tiny one-off ops; x stays f32 and is cast in-kernel.
    w1_bf = w1.astype(jnp.bfloat16)
    w2_bf = w2.astype(jnp.bfloat16)

    # VMEM budget: double-buffered x/out tiles + resident weights + f32
    # intermediates, with headroom; well inside v7x's 64 MiB physical VMEM.
    resident = (2 * _padded_vmem_bytes(tile_b, F, 4)      # x tiles (x2 bufs)
                + _padded_vmem_bytes(tile_b, F, 2)        # in-kernel bf16 x
                + 2 * _padded_vmem_bytes(tile_b, H, 4)    # h1 / h2
                + 2 * _padded_vmem_bytes(8, tile_b, 4)    # out rows (x2 bufs)
                + _padded_vmem_bytes(F, H, 2)
                + _padded_vmem_bytes(H, H, 2)
                + 3 * _padded_vmem_bytes(1, H, 4))
    vmem_limit = int(min(48 * 2**20, max(16 * 2**20, 3 * resident)))

    flops = 2 * rows * (F * H + H * H + H)
    bytes_accessed = (B * F * 4 + (F * H + H * H) * 2 + 3 * H * 4 + 4
                      + rows * 4)

    out = pl.pallas_call(
        _critic_kernel,
        out_shape=jax.ShapeDtypeStruct((num_tiles, 1, tile_b), jnp.float32),
        grid=(num_tiles,),
        in_specs=[
            pl.BlockSpec((tile_b, F), lambda i: (i, 0)),   # x: tiled over batch
            pl.BlockSpec((F, H), lambda i: (0, 0)),        # w1: VMEM-resident
            pl.BlockSpec((1, H), lambda i: (0, 0)),        # b1
            pl.BlockSpec((H, H), lambda i: (0, 0)),        # w2
            pl.BlockSpec((1, H), lambda i: (0, 0)),        # b2
            pl.BlockSpec((1, H), lambda i: (0, 0)),        # wh row
            pl.BlockSpec(memory_space=pltpu.MemorySpace.SMEM),  # bh scalar
        ],
        out_specs=pl.BlockSpec((1, 1, tile_b), lambda i: (i, 0, 0)),
        compiler_params=pltpu.CompilerParams(
            dimension_semantics=("parallel",),
            vmem_limit_bytes=vmem_limit),
        cost_estimate=pl.CostEstimate(
            flops=flops, transcendentals=0, bytes_accessed=bytes_accessed),
    )(x, w1_bf, b1, w2_bf, b2, wh_row, bh)

    # Lane-dense (num_tiles, 1, tile_b) -> (B,) values; drop the tail rows
    # coming from the partial last x block (garbage, never observed).
    return out.reshape(-1)[:B_orig]


def _orthogonal(key, shape, gain):
    """Deterministic orthogonal init (mimics nn.init.orthogonal_)."""
    rows, cols = shape
    n = max(rows, cols)
    a = jax.random.normal(key, (n, n), dtype=jnp.float32)
    q, _ = jnp.linalg.qr(a)
    return gain * q[:rows, :cols]


def make_params(key, input_size, hidden_size):
    k1, k2, k3 = jax.random.split(key, 3)
    sqrt2 = float(jnp.sqrt(2.0))
    # Hidden weights stored transposed: (in, out). Biases zero (init_weights).
    w1 = _orthogonal(k1, (input_size, hidden_size), sqrt2)
    b1 = jnp.zeros((1, hidden_size), jnp.float32)
    w2 = _orthogonal(k2, (hidden_size, hidden_size), sqrt2)
    b2 = jnp.zeros((1, hidden_size), jnp.float32)
    # head weight kept in PyTorch layout (1, H).
    wh_row = _orthogonal(k3, (1, hidden_size), 1.0)
    bh = jnp.zeros((1,), jnp.float32)
    return w1, b1, w2, b2, wh_row, bh


def reference_forward(x, w1, b1, w2, b2, wh_row, bh):
    h1 = jnp.maximum(x @ w1 + b1, 0.0)
    h2 = jnp.maximum(h1 @ w2 + b2, 0.0)
    return (h2 @ wh_row.T + bh)[:, 0]


if __name__ == "__main__":
    key = jax.random.PRNGKey(0)
    k_x, k_p, k_x2 = jax.random.split(key, 3)

    # Small test consistent with an MLP critic.
    B, INPUT_SIZE, HIDDEN = 8, 32, 32
    x = jax.random.normal(k_x, (B, INPUT_SIZE), dtype=jnp.float32)
    params = make_params(k_p, INPUT_SIZE, HIDDEN)

    value = critic_forward(x, *params)
    jax.block_until_ready(value)
    ref = reference_forward(x, *params)
    assert value.shape == (B,), value.shape
    # bf16 matmul operands (f32 accumulation) -> loose tolerance vs f32 ref.
    assert jnp.allclose(value, ref, atol=5e-2, rtol=5e-2), (
        float(jnp.max(jnp.abs(value - ref))))

    # Second run: multi-tile grid, partial trailing x block, lane-dense output.
    B2 = 640  # forces 2 grid steps (v7x two-tile minimum) + a partial block
    x2 = jax.random.normal(k_x2, (B2, INPUT_SIZE), dtype=jnp.float32)
    value2 = critic_forward(x2, *params)
    jax.block_until_ready(value2)
    ref2 = reference_forward(x2, *params)
    assert value2.shape == (B2,), value2.shape
    assert jnp.allclose(value2, ref2, atol=5e-2, rtol=5e-2), (
        float(jnp.max(jnp.abs(value2 - ref2))))

    print("KERNEL_OK")
</pallas_src>

<mosaic_0001>
module attributes {stable_mosaic.version = 11 : i64} {
  func.func @_critic_kernel(%arg0: i32, %arg1: memref<8x32xf32, #tpu.memory_space<vmem>>, %arg2: memref<32x32xbf16, #tpu.memory_space<vmem>>, %arg3: memref<1x32xf32, #tpu.memory_space<vmem>>, %arg4: memref<32x32xbf16, #tpu.memory_space<vmem>>, %arg5: memref<1x32xf32, #tpu.memory_space<vmem>>, %arg6: memref<1x32xf32, #tpu.memory_space<vmem>>, %arg7: memref<1xf32, #tpu.memory_space<smem>>, %arg8: memref<1x1x8xf32, #tpu.memory_space<vmem>>) attributes {dimension_semantics = [#tpu.dimension_semantics<parallel>], iteration_bounds = array<i64: 1>, scalar_prefetch = 0 : i64, scratch_operands = 0 : i64, tpu.core_type = #tpu.core_type<tc>, window_params = [{transform_indices = @transform_0, window_bounds = array<i64: 8, 32>}, {pipeline_mode = #tpu.pipeline_mode<synchronous>, transform_indices = @transform_1, window_bounds = array<i64: 32, 32>}, {pipeline_mode = #tpu.pipeline_mode<synchronous>, transform_indices = @transform_2, window_bounds = array<i64: 1, 32>}, {pipeline_mode = #tpu.pipeline_mode<synchronous>, transform_indices = @transform_3, window_bounds = array<i64: 32, 32>}, {pipeline_mode = #tpu.pipeline_mode<synchronous>, transform_indices = @transform_4, window_bounds = array<i64: 1, 32>}, {pipeline_mode = #tpu.pipeline_mode<synchronous>, transform_indices = @transform_5, window_bounds = array<i64: 1, 32>}, {transform_indices = @transform_6, window_bounds = array<i64: 1>}, {transform_indices = @transform_7, window_bounds = array<i64: 1, 1, 8>}]} {
    %c0 = arith.constant 0 : index
    %c0_0 = arith.constant 0 : index
    %0 = vector.load %arg1[%c0, %c0_0] : memref<8x32xf32, #tpu.memory_space<vmem>>, vector<8x32xf32>
    %1 = arith.truncf %0 : vector<8x32xf32> to vector<8x32xbf16>
    %c0_1 = arith.constant 0 : index
    %c0_2 = arith.constant 0 : index
    %2 = vector.load %arg2[%c0_1, %c0_2] : memref<32x32xbf16, #tpu.memory_space<vmem>>, vector<32x32xbf16>
    %cst = arith.constant dense<0.000000e+00> : vector<8x32xf32>
    %3 = tpu.matmul %1, %2, %cst {dimension_numbers = #tpu.dot_dimension_numbers<[1], [0], [0], [1], [0, 0, 1, 1], [], []>} : vector<8x32xbf16>, vector<32x32xbf16>, vector<8x32xf32> -> vector<8x32xf32>
    %c0_3 = arith.constant 0 : index
    %c0_4 = arith.constant 0 : index
    %4 = vector.load %arg3[%c0_3, %c0_4] : memref<1x32xf32, #tpu.memory_space<vmem>>, vector<1x32xf32>
    %5 = vector.broadcast %4 : vector<1x32xf32> to vector<8x32xf32>
    %6 = arith.addf %3, %5 : vector<8x32xf32>
    %cst_5 = arith.constant 0.000000e+00 : f32
    %7 = vector.broadcast %cst_5 : f32 to vector<8x32xf32>
    %8 = arith.maximumf %6, %7 : vector<8x32xf32>
    %9 = arith.truncf %8 : vector<8x32xf32> to vector<8x32xbf16>
    %c0_6 = arith.constant 0 : index
    %c0_7 = arith.constant 0 : index
    %10 = vector.load %arg4[%c0_6, %c0_7] : memref<32x32xbf16, #tpu.memory_space<vmem>>, vector<32x32xbf16>
    %cst_8 = arith.constant dense<0.000000e+00> : vector<8x32xf32>
    %11 = tpu.matmul %9, %10, %cst_8 {dimension_numbers = #tpu.dot_dimension_numbers<[1], [0], [0], [1], [0, 0, 1, 1], [], []>} : vector<8x32xbf16>, vector<32x32xbf16>, vector<8x32xf32> -> vector<8x32xf32>
    %c0_9 = arith.constant 0 : index
    %c0_10 = arith.constant 0 : index
    %12 = vector.load %arg5[%c0_9, %c0_10] : memref<1x32xf32, #tpu.memory_space<vmem>>, vector<1x32xf32>
    %13 = vector.broadcast %12 : vector<1x32xf32> to vector<8x32xf32>
    %14 = arith.addf %11, %13 : vector<8x32xf32>
    %cst_11 = arith.constant 0.000000e+00 : f32
    %15 = vector.broadcast %cst_11 : f32 to vector<8x32xf32>
    %16 = arith.maximumf %14, %15 : vector<8x32xf32>
    %c0_12 = arith.constant 0 : index
    %c0_13 = arith.constant 0 : index
    %17 = vector.load %arg6[%c0_12, %c0_13] : memref<1x32xf32, #tpu.memory_space<vmem>>, vector<1x32xf32>
    "tpu.trace_start"() <{level = 10 : i32, message = "oh,bh->ob"}> : () -> ()
    %cst_14 = arith.constant dense<0.000000e+00> : vector<1x8xf32>
    %18 = tpu.matmul %17, %16, %cst_14 {dimension_numbers = #tpu.dot_dimension_numbers<[1], [1], [0], [0], [0, 0, 1, 0], [], []>} : vector<1x32xf32>, vector<8x32xf32>, vector<1x8xf32> -> vector<1x8xf32>
    "tpu.trace_stop"() : () -> ()
    %c0_15 = arith.constant 0 : index
    %19 = memref.load %arg7[%c0_15] : memref<1xf32, #tpu.memory_space<smem>>
    %20 = vector.broadcast %19 : f32 to vector<1x8xf32>
    %21 = arith.addf %18, %20 : vector<1x8xf32>
    %c0_16 = arith.constant 0 : index
    %c0_17 = arith.constant 0 : index
    %c0_18 = arith.constant 0 : index
    %22 = vector.load %arg8[%c0_16, %c0_17, %c0_18] : memref<1x1x8xf32, #tpu.memory_space<vmem>>, vector<1x1x8xf32>
    %23 = vector.shape_cast %22 : vector<1x1x8xf32> to vector<1x8xf32>
    %24 = vector.shape_cast %21 : vector<1x8xf32> to vector<1x1x8xf32>
    tpu.vector_store %arg8[%c0_16, %c0_17, %c0_18], %24 {strides = array<i32>} : memref<1x1x8xf32, #tpu.memory_space<vmem>>, vector<1x1x8xf32>,
    return
  }
  func.func @transform_0(%arg0: i32) -> (i32, i32) {
    %c0_i32 = arith.constant 0 : i32
    %c0_i32_0 = arith.constant 0 : i32
    return %arg0, %c0_i32 : i32, i32
  }
  func.func @transform_1(%arg0: i32) -> (i32, i32) {
    %c0_i32 = arith.constant 0 : i32
    %c0_i32_0 = arith.constant 0 : i32
    %c0_i32_1 = arith.constant 0 : i32
    return %c0_i32, %c0_i32_0 : i32, i32
  }
  func.func @transform_2(%arg0: i32) -> (i32, i32) {
    %c0_i32 = arith.constant 0 : i32
    %c0_i32_0 = arith.constant 0 : i32
    %c0_i32_1 = arith.constant 0 : i32
    return %c0_i32, %c0_i32_0 : i32, i32
  }
  func.func @transform_3(%arg0: i32) -> (i32, i32) {
    %c0_i32 = arith.constant 0 : i32
    %c0_i32_0 = arith.constant 0 : i32
    %c0_i32_1 = arith.constant 0 : i32
    return %c0_i32, %c0_i32_0 : i32, i32
  }
  func.func @transform_4(%arg0: i32) -> (i32, i32) {
    %c0_i32 = arith.constant 0 : i32
    %c0_i32_0 = arith.constant 0 : i32
    %c0_i32_1 = arith.constant 0 : i32
    return %c0_i32, %c0_i32_0 : i32, i32
  }
  func.func @transform_5(%arg0: i32) -> (i32, i32) {
    %c0_i32 = arith.constant 0 : i32
    %c0_i32_0 = arith.constant 0 : i32
    %c0_i32_1 = arith.constant 0 : i32
    return %c0_i32, %c0_i32_0 : i32, i32
  }
  func.func @transform_6(%arg0: i32) -> i32 {
    %c0_i32 = arith.constant 0 : i32
    %c0_i32_0 = arith.constant 0 : i32
    return %c0_i32 : i32
  }
  func.func @transform_7(%arg0: i32) -> (i32, i32, i32) {
    %c0_i32 = arith.constant 0 : i32
    %c0_i32_0 = arith.constant 0 : i32
    %c0_i32_1 = arith.constant 0 : i32
    return %arg0, %c0_i32, %c0_i32_0 : i32, i32, i32
  }
}

</mosaic_0001>

<llo_original>
// kernel: critic_forward.1
$region0: #{critic_forward.1}
  #allocation0 [shape = 'u32[]', space=smem, size = 0x4, offset = 0x4, fixed_abs, tag = 'smem constant byte address 0x4 - core index']
  #allocation1 [shape = 'u32[144,128]{1,0:T(1,128)}', space=vmem, size = 0x12000, scoped, tag = 'internal scratch']
  #allocation2 [shape = 'f32[1]{0:T(128)S(6)}', space=smem, size = 0x200, scoped, tag = 'scoped memory for critic_forward.1']
  %s0 = inlined_call_operand.vmem [shape: f32[8,32], index: 0, kind: input, shape index: {}]
  %s1 = inlined_call_operand.vmem [shape: bf16[32,32], index: 1, kind: input, shape index: {}]
  %s2 = inlined_call_operand.vmem [shape: f32[1,32], index: 2, kind: input, shape index: {}]
  %s3 = inlined_call_operand.vmem [shape: bf16[32,32], index: 3, kind: input, shape index: {}]
  %s4 = inlined_call_operand.vmem [shape: f32[1,32], index: 4, kind: input, shape index: {}]
  %s5 = inlined_call_operand.vmem [shape: f32[1,32], index: 5, kind: input, shape index: {}]
  %s6 = inlined_call_operand.<no memory space> [shape: f32[1], index: 6, kind: input, shape index: {}]
  %s7 = inlined_call_operand.hbm [shape: f32[1,1,8], index: 7, kind: output, shape index: {}]
  %s8 = sld [smem:[#allocation0]]
  $region38: #{critic_forward.1} parent=0
    _
  %s10 = ssub.s32 1, %s8
  %s11 = scalar_select 0, %s10, %s8
  %12 = sst [smem:[#allocation2]] %s6
  $region1: #{critic_forward.1} parent=0
    #allocation3 [shape = 'u8[512]{0}', space=vmem, size = 0x400, scoped, tag = 'output window, operand 0, single buffered']
    #allocation4 [shape = 's32[1]{0}', space=sflag, size = 0x4, scoped, tag = 'scoped memory for critic_forward.1']
    %13 = vsyncpa [#allocation4], 0
    // Predicated region
    $region2: #{critic_forward.1} parent=1 // pred_check
      _
    $region3: #{critic_forward.1} parent=1 // pred_check_branch
      %15 = sbr.rel (0) target = $region5
    $region4: #{critic_forward.1} parent=1 // pred_region
      _
    $region5: #{critic_forward.1} parent=1 // pred_fallthru
      _
    // Predicated region
    $region6: #{critic_forward.1} parent=1 // pred_check
      _
    $region7: #{critic_forward.1} parent=1 // pred_check_branch
      %17 = sbr.rel (0) target = $region9
    $region8: #{critic_forward.1} parent=1 // pred_region
      _
    $region9: #{critic_forward.1} parent=1 // pred_fallthru
      _
    // Predicated region
    $region10: #{critic_forward.1} parent=1 // pred_check
      _
    $region11: #{critic_forward.1} parent=1 // pred_check_branch
      %19 = sbr.rel (0) target = $region13
    $region12: #{critic_forward.1} parent=1 // pred_region
      _
    $region13: #{critic_forward.1} parent=1 // pred_fallthru
      _
    // Predicated region
    $region14: #{critic_forward.1} parent=1 // pred_check
      _
    $region15: #{critic_forward.1} parent=1 // pred_check_branch
      %21 = sbr.rel (0) target = $region17
    $region16: #{critic_forward.1} parent=1 // pred_region
      _
    $region17: #{critic_forward.1} parent=1 // pred_fallthru
      _
    // Predicated region
    $region18: #{critic_forward.1} parent=1 // pred_check
      _
    $region19: #{critic_forward.1} parent=1 // pred_check_branch
      %23 = sbr.rel (0) target = $region21
    $region20: #{critic_forward.1} parent=1 // pred_region
      _
    $region21: #{critic_forward.1} parent=1 // pred_fallthru
      _
    // Predicated region
    $region22: #{critic_forward.1} parent=1 // pred_check
      _
    $region23: #{critic_forward.1} parent=1 // pred_check_branch
      %25 = sbr.rel (0) target = $region25
    $region24: #{critic_forward.1} parent=1 // pred_region
      _
    $region25: #{critic_forward.1} parent=1 // pred_fallthru
      _
    // Predicated region
    $region26: #{critic_forward.1} parent=1 // pred_check
      _
    $region27: #{critic_forward.1} parent=1 // pred_check_branch
      %27 = sbr.rel (0) target = $region29
    $region28: #{critic_forward.1} parent=1 // pred_region
      _
    $region29: #{critic_forward.1} parent=1 // pred_fallthru
      _
    %v29 = vld [vmem:[%s0] sm:$0xff]
    %v30 = vpack.c.bf16 %v29, %v29
    %v31 = vld [vmem:[%s1] sm:$0xf]
    %v32 = vld [vmem:[%s1 + $0x4] sm:$0xf]
    %v33 = vld [vmem:[%s1 + $0x8] sm:$0xf]
    %v34 = vld [vmem:[%s1 + $0xc] sm:$0xf]
    %v35 = vld [vmem:[%s2] sm:$0x1]
    %v37 = vlaneseq
    %v38 = vshrl.u32 %v37, 7
    %v39 = vsub.s32 0, %v38
    %v40 = vrot.slane %v35, %v39
    %v46 = vunpack.c.l.b16 %v31
    %v47 = vunpack.c.l.b16 %v32
    %v48 = vunpack.c.l.b16 %v33
    %v49 = vunpack.c.l.b16 %v34
    %v50 = vpack.c.b16 %v47, %v46
    %v51 = vpack.c.b16 %v49, %v48
    %vm54 = vcmask 261120
    %v56 = vsel %vm54, %v30, 0
    %58 = vmatprep.subr.bf16.mxu0 0
    %59 = vmatpush1.bf16.msra.mxu0 %v50
    %60 = vmatprep.subr.bf16.mxu0 0
    %61 = vmatpush1.bf16.msra.mxu0 %v51
    %62 = vmatprep.subr.bf16.mxu0 0
    %63 = vmatpush1.bf16.msra.mxu0 0
    %64 = vmatprep.subr.bf16.mxu0 0
    %65 = vmatpush1.bf16.msra.mxu0 0
    %66 = vmatprep.subr.bf16.mxu0 0
    %67 = vmatpush1.bf16.msra.mxu0 0
    %68 = vmatprep.subr.bf16.mxu0 0
    %69 = vmatpush1.bf16.msra.mxu0 0
    %70 = vmatprep.subr.bf16.mxu0 0
    %71 = vmatpush1.bf16.msra.mxu0 0
    %72 = vmatprep.subr.bf16.mxu0 0
    %73 = vmatpush1.bf16.msra.mxu0 0
    %74 = vmatprep.subr.bf16.mxu0 0
    %75 = vmatpush1.bf16.msra.mxu0 0
    %76 = vmatprep.subr.bf16.mxu0 0
    %77 = vmatpush1.bf16.msra.mxu0 0
    %78 = vmatprep.subr.bf16.mxu0 0
    %79 = vmatpush1.bf16.msra.mxu0 0
    %80 = vmatprep.subr.bf16.mxu0 0
    %81 = vmatpush1.bf16.msra.mxu0 0
    %82 = vmatprep.subr.bf16.mxu0 0
    %83 = vmatpush1.bf16.msra.mxu0 0
    %84 = vmatprep.subr.bf16.mxu0 0
    %85 = vmatpush1.bf16.msra.mxu0 0
    %86 = vmatprep.subr.bf16.mxu0 0
    %87 = vmatpush1.bf16.msra.mxu0 0
    %88 = vmatprep.subr.bf16.mxu0 0
    %89 = vmatpush1.bf16.msra.mxu0 0
    %90 = vmatprep.mubr.bf16.mxu0 0
    %91 = vmatmul.mubr.bf16.gmra.mrb[0].mxu0 %v56
    %v92 = vpop.f32.mrb[0].mxu0
    %v93 = vadd.f32 %v40, %v92
    %v94 = vpop.f32.mrb[0].mxu0
    %v95 = vpop.f32.mrb[0].mxu0
    %v96 = vpop.f32.mrb[0].mxu0
    %97 = vdwg.mxu0
    %v98 = vmax.f32 %v93, 0.0
    %v99 = vpack.c.bf16 %v98, %v98
    %v100 = vld [vmem:[%s3] sm:$0xf]
    %v101 = vld [vmem:[%s3 + $0x4] sm:$0xf]
    %v102 = vld [vmem:[%s3 + $0x8] sm:$0xf]
    %v103 = vld [vmem:[%s3 + $0xc] sm:$0xf]
    %v104 = vld [vmem:[%s4] sm:$0x1]
    %v106 = vlaneseq
    %v107 = vshrl.u32 %v106, 7
    %v108 = vsub.s32 0, %v107
    %v109 = vrot.slane %v104, %v108
    %v115 = vunpack.c.l.b16 %v100
    %v116 = vunpack.c.l.b16 %v101
    %v117 = vunpack.c.l.b16 %v102
    %v118 = vunpack.c.l.b16 %v103
    %v119 = vpack.c.b16 %v116, %v115
    %v120 = vpack.c.b16 %v118, %v117
    %v124 = vsel %vm54, %v99, 0
    %126 = vmatprep.subr.bf16.mxu0 0
    %127 = vmatpush1.bf16.msra.mxu0 %v119
    %128 = vmatprep.subr.bf16.mxu0 0
    %129 = vmatpush1.bf16.msra.mxu0 %v120
    %130 = vmatprep.subr.bf16.mxu0 0
    %131 = vmatpush1.bf16.msra.mxu0 0
    %132 = vmatprep.subr.bf16.mxu0 0
    %133 = vmatpush1.bf16.msra.mxu0 0
    %134 = vmatprep.subr.bf16.mxu0 0
    %135 = vmatpush1.bf16.msra.mxu0 0
    %136 = vmatprep.subr.bf16.mxu0 0
    %137 = vmatpush1.bf16.msra.mxu0 0
    %138 = vmatprep.subr.bf16.mxu0 0
    %139 = vmatpush1.bf16.msra.mxu0 0
    %140 = vmatprep.subr.bf16.mxu0 0
    %141 = vmatpush1.bf16.msra.mxu0 0
    %142 = vmatprep.subr.bf16.mxu0 0
    %143 = vmatpush1.bf16.msra.mxu0 0
    %144 = vmatprep.subr.bf16.mxu0 0
    %145 = vmatpush1.bf16.msra.mxu0 0
    %146 = vmatprep.subr.bf16.mxu0 0
    %147 = vmatpush1.bf16.msra.mxu0 0
    %148 = vmatprep.subr.bf16.mxu0 0
    %149 = vmatpush1.bf16.msra.mxu0 0
    %150 = vmatprep.subr.bf16.mxu0 0
    %151 = vmatpush1.bf16.msra.mxu0 0
    %152 = vmatprep.subr.bf16.mxu0 0
    %153 = vmatpush1.bf16.msra.mxu0 0
    %154 = vmatprep.subr.bf16.mxu0 0
    %155 = vmatpush1.bf16.msra.mxu0 0
    %156 = vmatprep.subr.bf16.mxu0 0
    %157 = vmatpush1.bf16.msra.mxu0 0
    %158 = vmatprep.mubr.bf16.mxu0 0
    %159 = vmatmul.mubr.bf16.gmra.mrb[0].mxu0 %v124
    %v160 = vpop.f32.mrb[0].mxu0
    %v161 = vadd.f32 %v109, %v160
    %v162 = vpop.f32.mrb[0].mxu0
    %v163 = vpop.f32.mrb[0].mxu0
    %v164 = vpop.f32.mrb[0].mxu0
    %165 = vdwg.mxu0
    %v166 = vmax.f32 %v161, 0.0
    %v167 = vld [vmem:[%s5] sm:$0x1]
    %s168 = sld [smem:[#allocation2]]
    %v169 = vstv %s168
    %v171 = vsel %vm54, %v167, 0
    %v174 = vsel %vm54, %v166, 0
    %176 = vmatprep.subr.mxu0 0.0
    %177 = vmatpush1.xpose.msra.mxu0 %v174
    %178 = vmatprep.subr.mxu0 0.0
    %179 = vmatpush1.xpose.msra.mxu0 0.0
    %180 = vmatprep.subr.mxu0 0.0
    %181 = vmatpush1.xpose.msra.mxu0 0.0
    %182 = vmatprep.subr.mxu0 0.0
    %183 = vmatpush1.xpose.msra.mxu0 0.0
    %184 = vmatprep.subr.mxu0 0.0
    %185 = vmatpush1.xpose.msra.mxu0 0.0
    %186 = vmatprep.subr.mxu0 0.0
    %187 = vmatpush1.xpose.msra.mxu0 0.0
    %188 = vmatprep.subr.mxu0 0.0
    %189 = vmatpush1.xpose.msra.mxu0 0.0
    %190 = vmatprep.subr.mxu0 0.0
    %191 = vmatpush1.xpose.msra.mxu0 0.0
    %192 = vmatprep.subr.mxu0 0.0
    %193 = vmatpush1.xpose.msra.mxu0 0.0
    %194 = vmatprep.subr.mxu0 0.0
    %195 = vmatpush1.xpose.msra.mxu0 0.0
    %196 = vmatprep.subr.mxu0 0.0
    %197 = vmatpush1.xpose.msra.mxu0 0.0
    %198 = vmatprep.subr.mxu0 0.0
    %199 = vmatpush1.xpose.msra.mxu0 0.0
    %200 = vmatprep.subr.mxu0 0.0
    %201 = vmatpush1.xpose.msra.mxu0 0.0
    %202 = vmatprep.subr.mxu0 0.0
    %203 = vmatpush1.xpose.msra.mxu0 0.0
    %204 = vmatprep.subr.mxu0 0.0
    %205 = vmatpush1.xpose.msra.mxu0 0.0
    %206 = vmatprep.subr.mxu0 0.0
    %207 = vmatpush1.xpose.msra.mxu0 0.0
    %208 = vmatprep.subr.mxu0 0.0
    %209 = vmatpush1.xpose.msra.mxu0 0.0
    %210 = vmatprep.subr.mxu0 0.0
    %211 = vmatpush1.xpose.msra.mxu0 0.0
    %212 = vmatprep.subr.mxu0 0.0
    %213 = vmatpush1.xpose.msra.mxu0 0.0
    %214 = vmatprep.subr.mxu0 0.0
    %215 = vmatpush1.xpose.msra.mxu0 0.0
    %216 = vmatprep.subr.mxu0 0.0
    %217 = vmatpush1.xpose.msra.mxu0 0.0
    %218 = vmatprep.subr.mxu0 0.0
    %219 = vmatpush1.xpose.msra.mxu0 0.0
    %220 = vmatprep.subr.mxu0 0.0
    %221 = vmatpush1.xpose.msra.mxu0 0.0
    %222 = vmatprep.subr.mxu0 0.0
    %223 = vmatpush1.xpose.msra.mxu0 0.0
    %224 = vmatprep.subr.mxu0 0.0
    %225 = vmatpush1.xpose.msra.mxu0 0.0
    %226 = vmatprep.subr.mxu0 0.0
    %227 = vmatpush1.xpose.msra.mxu0 0.0
    %228 = vmatprep.subr.mxu0 0.0
    %229 = vmatpush1.xpose.msra.mxu0 0.0
    %230 = vmatprep.subr.mxu0 0.0
    %231 = vmatpush1.xpose.msra.mxu0 0.0
    %232 = vmatprep.subr.mxu0 0.0
    %233 = vmatpush1.xpose.msra.mxu0 0.0
    %234 = vmatprep.subr.mxu0 0.0
    %235 = vmatpush1.xpose.msra.mxu0 0.0
    %236 = vmatprep.subr.mxu0 0.0
    %237 = vmatpush1.xpose.msra.mxu0 0.0
    %238 = vmatprep.subr.mxu0 0.0
    %239 = vmatpush1.xpose.msra.mxu0 0.0
    %240 = vmatprep.mubr.f32.mxu0 0.0
    %241 = vmatmul.mubr.f32.gmra.mrb[0].mxu0 %v171
    %v242 = vpop.f32.mrb[0].mxu0
    %v243 = vadd.f32 %v169, %v242
    %v244 = vpop.f32.mrb[0].mxu0
    %245 = vdwg.mxu0
    %vm246 = vcmask 57344
    %247 = vst.msk [vmem:[#allocation3] sm:$0x1] %vm246, %v243
    // Predicated region
    $region30: #{critic_forward.1} parent=1 // pred_check
      _
    $region31: #{critic_forward.1} parent=1 // pred_check_branch
      %249 = sbr.rel (0) target = $region33
    $region32: #{critic_forward.1} parent=1 // pred_region
      %s251 = ssub.s32 16, 16
      %252 = vsyncadd [#allocation4], %s251
      %s254 = sshll.u32 [#allocation3], 4
      %s255 = int_to_ptr.vmem [resolvable:$true] %s254
      %257 = dma.vmem_to_hbm [thread:$0]  %s255, 16, %s7, [#allocation4]
    $region33: #{critic_forward.1} parent=1 // pred_fallthru
      _
    // Predicated region
    $region34: #{critic_forward.1} parent=1 // pred_check
      _
    $region35: #{critic_forward.1} parent=1 // pred_check_branch
      %259 = sbr.rel (0) target = $region37
    $region36: #{critic_forward.1} parent=1 // pred_region
      %260 = dma.done [#allocation4], 16
    $region37: #{critic_forward.1} parent=1 // pred_fallthru
      _
    %261 = vsyncpa [#allocation4], 1

</llo_original>
